<compile_context>
chip_gen: v6e
topology: v6e:2x2x1
jax: 0.10.0
libtpu: 0.0.40
codegen_flags: <defaults>
</compile_context>

<pallas_src>
import functools

import jax
import jax.numpy as jnp
from jax import lax
from jax.experimental import pallas as pl
from jax.experimental.pallas import tpu as pltpu


def _round_up(x: int, m: int) -> int:
    return ((x + m - 1) // m) * m


def _vmem_capacity_bytes() -> int:
    """Per-TensorCore VMEM capacity; conservative (v7x) fallback if unknown."""
    try:
        cap = int(getattr(pltpu.get_tpu_info(), "vmem_capacity_bytes", 0))
        if cap > 0:
            return cap
    except Exception:
        pass
    return 64 * 1024 * 1024


def _is_multicore_chip() -> bool:
    """True for chips with >1 TensorCore per chip (v7x)."""
    try:
        kind = jax.devices()[0].device_kind.lower()
        return "v7" in kind or "7x" in kind
    except Exception:
        return False


# --------------------------------------------------------------------------- #
# Kernels
# --------------------------------------------------------------------------- #
def _single_block_kernel(a_ref, b_ref, o_ref):
    """Whole problem lives in VMEM: one MXU matmul, direct store."""
    o_ref[...] = jnp.dot(
        a_ref[...], b_ref[...], preferred_element_type=jnp.float32
    ).astype(o_ref.dtype)


def _block_dot(a_ref, b_ref, k_idx, *, k_total, tk, mask):
    """One (tm,tk)x(tk,tn) MXU matmul; optionally zero-mask the K tail of both
    operands (0 * garbage could be NaN, so both sides are masked)."""
    a = a_ref[...]
    b = b_ref[...]
    if mask:
        k_base = k_idx * tk
        ak = lax.broadcasted_iota(jnp.int32, a.shape, 1) + k_base
        a = jnp.where(ak < k_total, a, jnp.zeros_like(a))
        bk = lax.broadcasted_iota(jnp.int32, b.shape, 0) + k_base
        b = jnp.where(bk < k_total, b, jnp.zeros_like(b))
    return jnp.dot(a, b, preferred_element_type=jnp.float32)


def _tiled_kernel_accout(a_ref, b_ref, o_ref, *, k_total, tk, mask_k):
    """f32 output: accumulate directly into the resident output block.

    grid = (M/tm, N/tn, K/tk); K (axis 2) is the reduction axis.  The output
    BlockSpec ignores k, so the block stays in VMEM across the whole K loop —
    no separate accumulator scratch and no final copy/cast are needed.
    """
    k_idx = pl.program_id(2)
    last = pl.num_programs(2) - 1

    @pl.when(k_idx == 0)
    def _():
        o_ref[...] = jnp.zeros_like(o_ref)

    if mask_k:
        # Masking is only needed on the final K step; all other steps run an
        # unmasked dot (no iota/cmp/select VPU work competing with MXU feed).
        @pl.when(k_idx != last)
        def _():
            o_ref[...] += _block_dot(
                a_ref, b_ref, k_idx, k_total=k_total, tk=tk, mask=False
            )

        @pl.when(k_idx == last)
        def _():
            o_ref[...] += _block_dot(
                a_ref, b_ref, k_idx, k_total=k_total, tk=tk, mask=True
            )
    else:
        o_ref[...] += _block_dot(
            a_ref, b_ref, k_idx, k_total=k_total, tk=tk, mask=False
        )


def _tiled_kernel_scratch(a_ref, b_ref, o_ref, acc_ref, *, k_total, tk, mask_k):
    """Non-f32 output: f32 scratch accumulator, single cast/store on last step."""
    k_idx = pl.program_id(2)
    last = pl.num_programs(2) - 1

    @pl.when(k_idx == 0)
    def _():
        acc_ref[...] = jnp.zeros_like(acc_ref)

    if mask_k:
        @pl.when(k_idx != last)
        def _():
            acc_ref[...] += _block_dot(
                a_ref, b_ref, k_idx, k_total=k_total, tk=tk, mask=False
            )

        @pl.when(k_idx == last)
        def _():
            acc_ref[...] += _block_dot(
                a_ref, b_ref, k_idx, k_total=k_total, tk=tk, mask=True
            )
    else:
        acc_ref[...] += _block_dot(
            a_ref, b_ref, k_idx, k_total=k_total, tk=tk, mask=False
        )

    @pl.when(k_idx == last)
    def _():
        o_ref[...] = acc_ref[...].astype(o_ref.dtype)


# --------------------------------------------------------------------------- #
# Wrapper
# --------------------------------------------------------------------------- #
@functools.partial(jax.jit, static_argnames=("tm", "tn", "tk", "use_bf16"))
def matmul(a, b, *, tm=None, tn=None, tk=None, use_bf16=False):
    M, K = a.shape
    Kb, N = b.shape
    assert K == Kb, f"inner dims mismatch: {K} vs {Kb}"
    assert jnp.issubdtype(a.dtype, jnp.floating) and jnp.issubdtype(
        b.dtype, jnp.floating
    ), "matmul kernel supports floating-point inputs only"
    out_dtype = jnp.result_type(a.dtype, b.dtype)

    if use_bf16:
        # Optional speed mode: bf16 inputs + f32 accumulation.  Changes numerics
        # vs float32 torch.matmul, so it is opt-in only.
        a = a.astype(jnp.bfloat16)
        b = b.astype(jnp.bfloat16)

    in_bytes = jnp.dtype(a.dtype).itemsize
    out_bytes = jnp.dtype(out_dtype).itemsize

    # Trace-time hardware knowledge (tile defaults + VMEM budget).
    vmem_cap = _vmem_capacity_bytes()
    vmem_budget = min(int(vmem_cap * 0.75), vmem_cap - 8 * 1024 * 1024)
    multicore = _is_multicore_chip()

    # Layout-padded sizes (what actually occupies VMEM given (sublane,128)
    # tiling; sublane packing depends on dtype width: f32 -> 8, bf16 -> 16).
    sub_in = 8 * (4 // max(1, min(in_bytes, 4)))
    Mp = _round_up(M, sub_in)
    Kp = _round_up(K, 128)
    Np = _round_up(N, 128)

    # ------------------------- single-block fast path ------------------------ #
    padded_bytes = (Mp * Kp + Kp * Np) * in_bytes + Mp * Np * max(out_bytes, 4)
    fast_cap = 12 * 1024 * 1024
    if Mp <= 1024 and Np <= 1024 and Kp <= 2048 and padded_bytes <= fast_cap:
        ce = pl.CostEstimate(
            flops=2 * M * N * K,
            transcendentals=0,
            bytes_accessed=(M * K + K * N) * in_bytes + M * N * out_bytes,
        )
        return pl.pallas_call(
            _single_block_kernel,
            out_shape=jax.ShapeDtypeStruct((M, N), out_dtype),
            cost_estimate=ce,
            compiler_params=pltpu.CompilerParams(
                vmem_limit_bytes=int(
                    min(max(4 * padded_bytes, 16 * 1024 * 1024), vmem_budget)
                )
            ),
        )(a, b)

    # -------------------------------- tiled path ------------------------------ #
    # Generation-aware defaults: bigger output tiles where VMEM allows (v5e/v6e,
    # 128 MiB) to cut HBM re-reads; conservative on v7x (64 MiB per TC).
    big_vmem = vmem_budget >= 80 * 1024 * 1024
    if tm is None:
        tm = 1024 if big_vmem else 512
    if tn is None:
        tn = 1024 if big_vmem else 512
    if tk is None:
        tk = 512

    # Clamp tiles to the (layout-padded) problem; keep the (sublane,128)
    # constraint: second-to-last dims multiples of 8, last dims multiples of 128.
    tm_eff = min(_round_up(tm, sub_in), Mp)
    tn_eff = min(_round_up(tn, 128), Np)
    tk_eff = min(_round_up(tk, 128), Kp)

    acc_into_out = out_dtype == jnp.float32

    def _need(tm_, tn_, tk_):
        n = 2 * (tm_ * tk_ + tk_ * tn_) * in_bytes + 2 * tm_ * tn_ * out_bytes
        if not acc_into_out:
            n += tm_ * tn_ * 4
        return n

    # Safety: shrink tiles until the double-buffered working set fits the budget.
    while _need(tm_eff, tn_eff, tk_eff) > vmem_budget:
        if tk_eff >= max(tm_eff, tn_eff) and tk_eff > 128:
            tk_eff = max(128, _round_up(tk_eff // 2, 128))
        elif tn_eff >= tm_eff and tn_eff > 128:
            tn_eff = max(128, _round_up(tn_eff // 2, 128))
        elif tm_eff > sub_in:
            tm_eff = max(sub_in, _round_up(tm_eff // 2, sub_in))
        else:
            break

    gm = pl.cdiv(M, tm_eff)
    gn = pl.cdiv(N, tn_eff)
    gk = pl.cdiv(K, tk_eff)

    # v7x has 2 TensorCores: make sure there are >= 2 parallel grid points, by
    # splitting the dimension whose operand re-read cost is smaller
    # (A is re-read gn times, B is re-read gm times).
    if multicore and gm * gn == 1 and gk >= 2:
        if M * K <= K * N and Np >= 256:
            tn_eff = max(128, _round_up(pl.cdiv(Np, 2), 128))
        elif Mp >= 2 * sub_in:
            tm_eff = max(sub_in, _round_up(pl.cdiv(Mp, 2), sub_in))
        gm = pl.cdiv(M, tm_eff)
        gn = pl.cdiv(N, tn_eff)

    mask_k = (K % tk_eff) != 0

    if acc_into_out:
        kernel = functools.partial(
            _tiled_kernel_accout, k_total=K, tk=tk_eff, mask_k=mask_k
        )
        scratch_shapes = []
    else:
        kernel = functools.partial(
            _tiled_kernel_scratch, k_total=K, tk=tk_eff, mask_k=mask_k
        )
        scratch_shapes = [pltpu.VMEM((tm_eff, tn_eff), jnp.float32)]

    need = _need(tm_eff, tn_eff, tk_eff)
    vmem_limit = int(min(vmem_budget, max(2 * need, 32 * 1024 * 1024)))
    vmem_limit = int(min(max(vmem_limit, need + 2 * 1024 * 1024), vmem_budget))

    ce = pl.CostEstimate(
        flops=2 * M * N * K,
        transcendentals=0,
        bytes_accessed=(M * K * gn + K * N * gm) * in_bytes + M * N * out_bytes,
    )

    return pl.pallas_call(
        kernel,
        out_shape=jax.ShapeDtypeStruct((M, N), out_dtype),
        grid=(gm, gn, gk),
        in_specs=[
            pl.BlockSpec((tm_eff, tk_eff), lambda i, j, k: (i, k)),
            pl.BlockSpec((tk_eff, tn_eff), lambda i, j, k: (k, j)),
        ],
        out_specs=pl.BlockSpec((tm_eff, tn_eff), lambda i, j, k: (i, j)),
        scratch_shapes=scratch_shapes,
        compiler_params=pltpu.CompilerParams(
            dimension_semantics=("parallel", "parallel", "arbitrary"),
            vmem_limit_bytes=vmem_limit,
        ),
        cost_estimate=ce,
    )(a, b)


if __name__ == "__main__":
    key = jax.random.PRNGKey(0)
    ka, kb, kc, kd = jax.random.split(key, 4)

    # Small irregular shapes consistent with the module (non-multiples of 8/128).
    M, K, N = 100, 70, 52
    A = jax.random.normal(ka, (M, K), dtype=jnp.float32)
    B = jax.random.normal(kb, (K, N), dtype=jnp.float32)

    C = jax.block_until_ready(matmul(A, B))          # single-block fast path
    C_ref = A @ B
    assert C.shape == (M, N), C.shape
    assert jnp.allclose(C, C_ref, atol=1e-4, rtol=1e-4), "mismatch vs reference (small)"

    # Tiled path: partial M/N boundary blocks, K-tail masked ONLY on the last K
    # step, multi-step K accumulation directly into the f32 output block.
    M2, K2, N2 = 300, 257, 200
    A2 = jax.random.normal(kc, (M2, K2), dtype=jnp.float32)
    B2 = jax.random.normal(kd, (K2, N2), dtype=jnp.float32)

    C2 = jax.block_until_ready(matmul(A2, B2, tm=128, tn=128, tk=128))
    C2_ref = A2 @ B2
    assert C2.shape == (M2, N2), C2.shape
    assert jnp.allclose(C2, C2_ref, atol=1e-3, rtol=1e-3), "mismatch vs reference (tiled)"

    # Tiled path with a non-f32 output dtype (exercises the scratch-accumulator
    # kernel; f32 accumulation, single bf16 cast/store on the last K step).
    M3, K3, N3 = 144, 160, 192
    A3 = jax.random.normal(ka, (M3, K3), dtype=jnp.float32).astype(jnp.bfloat16)
    B3 = jax.random.normal(kb, (K3, N3), dtype=jnp.float32).astype(jnp.bfloat16)

    C3 = jax.block_until_ready(matmul(A3, B3, tm=128, tn=128, tk=128))
    C3_ref = jnp.dot(A3.astype(jnp.float32), B3.astype(jnp.float32))
    assert C3.shape == (M3, N3) and C3.dtype == jnp.bfloat16
    assert jnp.allclose(
        C3.astype(jnp.float32), C3_ref, rtol=2e-2, atol=2e-1
    ), "mismatch vs reference (bf16 tiled)"

    print("KERNEL_OK")
</pallas_src>

<mosaic_0001>
module attributes {stable_mosaic.version = 11 : i64} {
  func.func @_single_block_kernel(%arg0: memref<100x70xf32, #tpu.memory_space<vmem>>, %arg1: memref<70x52xf32, #tpu.memory_space<vmem>>, %arg2: memref<100x52xf32, #tpu.memory_space<vmem>>) attributes {dimension_semantics = [], scalar_prefetch = 0 : i64, scratch_operands = 0 : i64, tpu.core_type = #tpu.core_type<tc>} {
    %c0 = arith.constant 0 : index
    %c0_0 = arith.constant 0 : index
    %0 = vector.load %arg0[%c0, %c0_0] : memref<100x70xf32, #tpu.memory_space<vmem>>, vector<100x70xf32>
    %c0_1 = arith.constant 0 : index
    %c0_2 = arith.constant 0 : index
    %1 = vector.load %arg1[%c0_1, %c0_2] : memref<70x52xf32, #tpu.memory_space<vmem>>, vector<70x52xf32>
    %cst = arith.constant dense<0.000000e+00> : vector<100x52xf32>
    %2 = tpu.matmul %0, %1, %cst {dimension_numbers = #tpu.dot_dimension_numbers<[1], [0], [0], [1], [0, 0, 1, 1], [], []>} : vector<100x70xf32>, vector<70x52xf32>, vector<100x52xf32> -> vector<100x52xf32>
    %c0_3 = arith.constant 0 : index
    %c0_4 = arith.constant 0 : index
    %3 = vector.load %arg2[%c0_3, %c0_4] : memref<100x52xf32, #tpu.memory_space<vmem>>, vector<100x52xf32>
    tpu.vector_store %arg2[%c0_3, %c0_4], %2 {strides = array<i32>} : memref<100x52xf32, #tpu.memory_space<vmem>>, vector<100x52xf32>,
    return
  }
}

</mosaic_0001>

<llo_original>
// kernel: matmul.1
$region0: #{matmul.1}
  #allocation0 [shape = 'u32[]', space=smem, size = 0x4, offset = 0x4, fixed_abs, tag = 'smem constant byte address 0x4 - core index']
  #allocation1 [shape = 'u32[144,128]{1,0:T(1,128)}', space=vmem, size = 0x12000, scoped, tag = 'internal scratch']
  %s0 = inlined_call_operand.vmem [shape: f32[100,70], index: 0, kind: input, shape index: {}]
  %s1 = inlined_call_operand.vmem [shape: f32[70,52], index: 1, kind: input, shape index: {}]
  %s2 = inlined_call_operand.vmem [shape: f32[100,52], index: 2, kind: output, shape index: {}]
  %s3 = sld [smem:[#allocation0]]
  $region18: #{matmul.1} parent=0
    _
  %s5 = ssub.s32 1, %s3
  %s6 = scalar_select 0, %s5, %s3
  // Predicated region
  $region2: #{matmul.1} parent=0 // pred_check
    _
  $region3: #{matmul.1} parent=0 // pred_check_branch
    %8 = sbr.rel (0) target = $region5
  $region4: #{matmul.1} parent=0 // pred_region
    _
  $region5: #{matmul.1} parent=0 // pred_fallthru
    _
  // Predicated region
  $region6: #{matmul.1} parent=0 // pred_check
    _
  $region7: #{matmul.1} parent=0 // pred_check_branch
    %10 = sbr.rel (0) target = $region9
  $region8: #{matmul.1} parent=0 // pred_region
    _
  $region9: #{matmul.1} parent=0 // pred_fallthru
    _
  %v11 = vld [vmem:[%s0] sm:$0xff]
  %v12 = vld [vmem:[%s0 + $0x8] sm:$0xff]
  %v13 = vld [vmem:[%s0 + $0x10] sm:$0xff]
  %v14 = vld [vmem:[%s0 + $0x18] sm:$0xff]
  %v15 = vld [vmem:[%s0 + $0x20] sm:$0xff]
  %v16 = vld [vmem:[%s0 + $0x28] sm:$0xff]
  %v17 = vld [vmem:[%s0 + $0x30] sm:$0xff]
  %v18 = vld [vmem:[%s0 + $0x38] sm:$0xff]
  %v19 = vld [vmem:[%s0 + $0x40] sm:$0xff]
  %v20 = vld [vmem:[%s0 + $0x48] sm:$0xff]
  %v21 = vld [vmem:[%s0 + $0x50] sm:$0xff]
  %v22 = vld [vmem:[%s0 + $0x58] sm:$0xff]
  %v23 = vld [vmem:[%s0 + $0x60] sm:$0xf]
  %v24 = vld [vmem:[%s1] sm:$0xff]
  %v25 = vld [vmem:[%s1 + $0x8] sm:$0xff]
  %v26 = vld [vmem:[%s1 + $0x10] sm:$0xff]
  %v27 = vld [vmem:[%s1 + $0x18] sm:$0xff]
  %v28 = vld [vmem:[%s1 + $0x20] sm:$0xff]
  %v29 = vld [vmem:[%s1 + $0x28] sm:$0xff]
  %v30 = vld [vmem:[%s1 + $0x30] sm:$0xff]
  %v31 = vld [vmem:[%s1 + $0x38] sm:$0xff]
  %v32 = vld [vmem:[%s1 + $0x40] sm:$0x3f]
  %vm33 = vcmask 572416
  %v35 = vsel %vm33, %v11, 0
  %v38 = vsel %vm33, %v12, 0
  %v41 = vsel %vm33, %v13, 0
  %v44 = vsel %vm33, %v14, 0
  %v47 = vsel %vm33, %v15, 0
  %v50 = vsel %vm33, %v16, 0
  %v53 = vsel %vm33, %v17, 0
  %v56 = vsel %vm33, %v18, 0
  %v59 = vsel %vm33, %v19, 0
  %v62 = vsel %vm33, %v20, 0
  %v65 = vsel %vm33, %v21, 0
  %v68 = vsel %vm33, %v22, 0
  %v71 = vsel %vm33, %v23, 0
  %vm73 = vcmask 1045504
  %v75 = vsel %vm73, %v32, 0
  %77 = vmatprep.subr.mxu0 0.0
  %78 = vmatpush1.msra.mxu0 0.0
  %79 = vmatprep.subr.mxu0 0.0
  %80 = vmatpush1.msra.mxu0 0.0
  %81 = vmatprep.subr.mxu0 0.0
  %82 = vmatpush1.msra.mxu0 0.0
  %83 = vmatprep.subr.mxu0 0.0
  %84 = vmatpush1.msra.mxu0 0.0
  %85 = vmatprep.subr.mxu0 0.0
  %86 = vmatpush1.msra.mxu0 0.0
  %87 = vmatprep.subr.mxu0 0.0
  %88 = vmatpush1.msra.mxu0 0.0
  %89 = vmatprep.subr.mxu0 0.0
  %90 = vmatpush1.msra.mxu0 0.0
  %91 = vmatprep.subr.mxu0 0.0
  %92 = vmatpush1.msra.mxu0 %v75
  %93 = vmatprep.subr.mxu0 0.0
  %94 = vmatpush1.msra.mxu0 %v31
  %95 = vmatprep.subr.mxu0 0.0
  %96 = vmatpush1.msra.mxu0 %v30
  %97 = vmatprep.subr.mxu0 0.0
  %98 = vmatpush1.msra.mxu0 %v29
  %99 = vmatprep.subr.mxu0 0.0
  %100 = vmatpush1.msra.mxu0 %v28
  %101 = vmatprep.subr.mxu0 0.0
  %102 = vmatpush1.msra.mxu0 %v27
  %103 = vmatprep.subr.mxu0 0.0
  %104 = vmatpush1.msra.mxu0 %v26
  %105 = vmatprep.subr.mxu0 0.0
  %106 = vmatpush1.msra.mxu0 %v25
  %107 = vmatprep.subr.mxu0 0.0
  %108 = vmatpush1.msra.mxu0 %v24
  %109 = vmatprep.subr.mxu0 0.0
  %110 = vmatpush2.msra.mxu0 0.0
  %111 = vmatprep.subr.mxu0 0.0
  %112 = vmatpush2.msra.mxu0 0.0
  %113 = vmatprep.subr.mxu0 0.0
  %114 = vmatpush2.msra.mxu0 0.0
  %115 = vmatprep.subr.mxu0 0.0
  %116 = vmatpush2.msra.mxu0 0.0
  %117 = vmatprep.subr.mxu0 0.0
  %118 = vmatpush2.msra.mxu0 0.0
  %119 = vmatprep.subr.mxu0 0.0
  %120 = vmatpush2.msra.mxu0 0.0
  %121 = vmatprep.subr.mxu0 0.0
  %122 = vmatpush2.msra.mxu0 0.0
  %123 = vmatprep.subr.mxu0 0.0
  %124 = vmatpush2.msra.mxu0 0.0
  %125 = vmatprep.subr.mxu0 0.0
  %126 = vmatpush2.msra.mxu0 0.0
  %127 = vmatprep.subr.mxu0 0.0
  %128 = vmatpush2.msra.mxu0 0.0
  %129 = vmatprep.subr.mxu0 0.0
  %130 = vmatpush2.msra.mxu0 0.0
  %131 = vmatprep.subr.mxu0 0.0
  %132 = vmatpush2.msra.mxu0 0.0
  %133 = vmatprep.subr.mxu0 0.0
  %134 = vmatpush2.msra.mxu0 0.0
  %135 = vmatprep.subr.mxu0 0.0
  %136 = vmatpush2.msra.mxu0 0.0
  %137 = vmatprep.subr.mxu0 0.0
  %138 = vmatpush2.msra.mxu0 0.0
  %139 = vmatprep.subr.mxu0 0.0
  %140 = vmatpush2.msra.mxu0 0.0
  %141 = vmatprep.mubr.f32.mxu0 0.0
  %142 = vmatmul.mubr.f32.gmra.mxu0 %v35
  %v143 = vpop.f32.mrf.mxu0
  %v144 = vadd.f32 0.0, %v143
  %v145 = vpop.f32.mrf.mxu0
  %146 = vmatprep.mubr.f32.mxu0 0.0
  %147 = vmatmul.mubr.f32.gmra.mxu0 %v38
  %v148 = vpop.f32.mrf.mxu0
  %v149 = vadd.f32 0.0, %v148
  %v150 = vpop.f32.mrf.mxu0
  %151 = vmatprep.mubr.f32.mxu0 0.0
  %152 = vmatmul.mubr.f32.gmra.mxu0 %v41
  %v153 = vpop.f32.mrf.mxu0
  %v154 = vadd.f32 0.0, %v153
  %v155 = vpop.f32.mrf.mxu0
  %156 = vmatprep.mubr.f32.mxu0 0.0
  %157 = vmatmul.mubr.f32.gmra.mxu0 %v44
  %v158 = vpop.f32.mrf.mxu0
  %v159 = vadd.f32 0.0, %v158
  %v160 = vpop.f32.mrf.mxu0
  %161 = vmatprep.mubr.f32.mxu0 0.0
  %162 = vmatmul.mubr.f32.gmra.mxu0 %v47
  %v163 = vpop.f32.mrf.mxu0
  %v164 = vadd.f32 0.0, %v163
  %v165 = vpop.f32.mrf.mxu0
  %166 = vmatprep.mubr.f32.mxu0 0.0
  %167 = vmatmul.mubr.f32.gmra.mxu0 %v50
  %v168 = vpop.f32.mrf.mxu0
  %v169 = vadd.f32 0.0, %v168
  %v170 = vpop.f32.mrf.mxu0
  %171 = vmatprep.mubr.f32.mxu0 0.0
  %172 = vmatmul.mubr.f32.gmra.mxu0 %v53
  %v173 = vpop.f32.mrf.mxu0
  %v174 = vadd.f32 0.0, %v173
  %v175 = vpop.f32.mrf.mxu0
  %176 = vmatprep.mubr.f32.mxu0 0.0
  %177 = vmatmul.mubr.f32.gmra.mxu0 %v56
  %v178 = vpop.f32.mrf.mxu0
  %v179 = vadd.f32 0.0, %v178
  %v180 = vpop.f32.mrf.mxu0
  %181 = vmatprep.mubr.f32.mxu0 0.0
  %182 = vmatmul.mubr.f32.gmra.mxu0 %v59
  %v183 = vpop.f32.mrf.mxu0
  %v184 = vadd.f32 0.0, %v183
  %v185 = vpop.f32.mrf.mxu0
  %186 = vmatprep.mubr.f32.mxu0 0.0
  %187 = vmatmul.mubr.f32.gmra.mxu0 %v62
  %v188 = vpop.f32.mrf.mxu0
  %v189 = vadd.f32 0.0, %v188
  %v190 = vpop.f32.mrf.mxu0
  %191 = vmatprep.mubr.f32.mxu0 0.0
  %192 = vmatmul.mubr.f32.gmra.mxu0 %v65
  %v193 = vpop.f32.mrf.mxu0
  %v194 = vadd.f32 0.0, %v193
  %v195 = vpop.f32.mrf.mxu0
  %196 = vmatprep.mubr.f32.mxu0 0.0
  %197 = vmatmul.mubr.f32.gmra.mxu0 %v68
  %v198 = vpop.f32.mrf.mxu0
  %v199 = vadd.f32 0.0, %v198
  %v200 = vpop.f32.mrf.mxu0
  %201 = vmatprep.mubr.f32.mxu0 0.0
  %202 = vmatmul.mubr.f32.gmra.mxu0 %v71
  %v203 = vpop.f32.mrf.mxu0
  %v204 = vadd.f32 0.0, %v203
  %v205 = vpop.f32.mrf.mxu0
  %206 = vdwg.mxu0
  %vm207 = vcmask 424960
  %208 = vst.msk [vmem:[%s2] sm:$0xff] %vm207, %v144
  %209 = vst.msk [vmem:[%s2 + $0x8] sm:$0xff] %vm207, %v149
  %210 = vst.msk [vmem:[%s2 + $0x10] sm:$0xff] %vm207, %v154
  %211 = vst.msk [vmem:[%s2 + $0x18] sm:$0xff] %vm207, %v159
  %212 = vst.msk [vmem:[%s2 + $0x20] sm:$0xff] %vm207, %v164
  %213 = vst.msk [vmem:[%s2 + $0x28] sm:$0xff] %vm207, %v169
  %214 = vst.msk [vmem:[%s2 + $0x30] sm:$0xff] %vm207, %v174
  %215 = vst.msk [vmem:[%s2 + $0x38] sm:$0xff] %vm207, %v179
  %216 = vst.msk [vmem:[%s2 + $0x40] sm:$0xff] %vm207, %v184
  %217 = vst.msk [vmem:[%s2 + $0x48] sm:$0xff] %vm207, %v189
  %218 = vst.msk [vmem:[%s2 + $0x50] sm:$0xff] %vm207, %v194
  %219 = vst.msk [vmem:[%s2 + $0x58] sm:$0xff] %vm207, %v199
  %vm220 = vcmask 420864
  %221 = vst.msk [vmem:[%s2 + $0x60] sm:$0xf] %vm220, %v204
  // Predicated region
  $region10: #{matmul.1} parent=0 // pred_check
    _
  $region11: #{matmul.1} parent=0 // pred_check_branch
    %223 = sbr.rel (0) target = $region13
  $region12: #{matmul.1} parent=0 // pred_region
    _
  $region13: #{matmul.1} parent=0 // pred_fallthru
    _
  // Predicated region
  $region14: #{matmul.1} parent=0 // pred_check
    _
  $region15: #{matmul.1} parent=0 // pred_check_branch
    %225 = sbr.rel (0) target = $region17
  $region16: #{matmul.1} parent=0 // pred_region
    _
  $region17: #{matmul.1} parent=0 // pred_fallthru
    _

</llo_original>
